<compile_context>
chip_gen: v5e
topology: v5e:2x2
jax: 0.10.0
libtpu: 0.0.40
codegen_flags: <defaults>
</compile_context>

<pallas_src>
import numpy as np

import jax
import jax.numpy as jnp
from jax.experimental import pallas as pl
from jax.experimental.pallas import tpu as pltpu


# ----------------------------------------------------------------------------
# host-side parameter preparation (BN folding, block-diag / banded matrices)
# ----------------------------------------------------------------------------
def _bn_fold_np(gamma, beta, mean, var, eps=1e-5):
    gamma = np.asarray(gamma, np.float32)
    beta = np.asarray(beta, np.float32)
    mean = np.asarray(mean, np.float32)
    var = np.asarray(var, np.float32)
    scale = gamma / np.sqrt(var + eps)
    return scale, beta - mean * scale


def _band_conv3x3_np(w, scale, W):
    """Banded matmul weights for a 3x3 'same' conv on row-flattened planes.

    w: (Cout, Cin, 3, 3) torch-layout conv weight; BN scale is folded in.
    Returns B of shape (3, (W+2)*Cin, (W+2)*Cout) such that
        out_row[h] = sum_kh in_rows[h + kh] @ B[kh]
    where in_rows are rows of the zero-padded plane flattened as (W+2)*Cin and
    out_row is the conv output row flattened as (W+2)*Cout with EXACT zeros in
    the two border column groups (so it can feed the next conv directly).
    """
    Cout, Cin = w.shape[:2]
    Wp = W + 2
    ws = np.asarray(w, np.float32) * np.asarray(scale, np.float32)[:, None, None, None]
    B = np.zeros((3, Wp, Cin, Wp, Cout), np.float32)
    wp = np.arange(1, W + 1)
    for kh in range(3):
        for kw in range(3):
            # B[kh, wi, ic, wp, oc] = ws[oc, ic, kh, kw] with wi = wp-1+kw
            B[kh, wp - 1 + kw, :, wp, :] = ws[:, :, kh, kw].T
    return B.reshape(3, Wp * Cin, Wp * Cout)


def _interior_row_np(shift, W):
    """Per-channel BN shift tiled across a padded row, zero at the borders."""
    C = shift.shape[0]
    row = np.zeros((W + 2, C), np.float32)
    row[1:W + 1, :] = np.asarray(shift, np.float32)[None, :]
    return row.reshape(1, (W + 2) * C)


def _prepare_params(params, H, W, Wx):
    """H, W: skip-connection spatial size; Wx: width of x before upsampling."""
    f32 = np.float32
    bf16 = jnp.bfloat16
    Wp = W + 2

    # ---- ConvTranspose2d(k=2, s=2) as a block-diagonal matmul ----------------
    up_w = np.asarray(params["up_w"], f32)               # (Cin, Co, 2, 2)
    up_b = np.asarray(params["up_b"], f32)                # (Co,)
    Cin, Co = up_w.shape[:2]
    idx = np.arange(Wx)
    wb = np.zeros((2, Wx, Cin, Wx, 2, Co), f32)
    for di in range(2):
        for dj in range(2):
            wb[di, idx, :, idx, dj, :] = up_w[:, :, di, dj]    # (Cin, Co)
    wb = wb.reshape(2, Wx * Cin, 2 * Wx * Co)
    bb = np.tile(up_b, 2 * Wx).reshape(1, 2 * Wx * Co)

    # ---- attention gate: fold BN into the 1x1 weights, block-diagonalize -----
    att_wg = np.asarray(params["att_wg"], f32)[:, :, 0, 0]    # (F, Cg)
    att_wx = np.asarray(params["att_wx"], f32)[:, :, 0, 0]    # (F, Cl)
    att_wp = np.asarray(params["att_wpsi"], f32)[:, :, 0, 0]  # (1, F)
    F = att_wg.shape[0]
    Cg, Cl = att_wg.shape[1], att_wx.shape[1]
    sg, hg = _bn_fold_np(*params["att_bn_g"])
    sx, hx = _bn_fold_np(*params["att_bn_x"])
    sp_, hp_ = _bn_fold_np(*params["att_bn_psi"])
    wg_col = (att_wg * sg[:, None]).T                      # (Cg, F)
    wx_col = (att_wx * sx[:, None]).T                      # (Cl, F)
    wpsi_v = att_wp[0] * sp_[0]                            # (F,)

    idxp = np.arange(Wp)
    wgbd = np.zeros((Wp, Cg, Wp, F), f32)
    wgbd[idxp, :, idxp, :] = wg_col
    wxbd = np.zeros((Wp, Cl, Wp, F), f32)
    wxbd[idxp, :, idxp, :] = wx_col
    wpsel = np.zeros((Wp, F, Wp), f32)                     # per-pixel psi reduce
    wpsel[idxp, :, idxp] = wpsi_v
    expand = np.zeros((Wp, Wp, Cl), f32)                   # psi -> Cl lanes
    expand[idxp, idxp, :] = 1.0
    bgx = np.tile(hg + hx, Wp).reshape(1, Wp * F)
    bpsi = np.full((1, 1), hp_[0], f32)

    # ---- double 3x3 conv: banded matrices with BN scale folded in ------------
    c1_w = np.asarray(params["c1_w"], f32)                 # (C1, Cl+Cg, 3, 3)
    s1, h1 = _bn_fold_np(*params["c1_bn"])
    c2_w = np.asarray(params["c2_w"], f32)                 # (C2, C1, 3, 3)
    s2, h2 = _bn_fold_np(*params["c2_bn"])
    # cat = [skip_att (Cl) | g (Cg)] -> split conv1 weights, no in-kernel concat
    b1s = _band_conv3x3_np(c1_w[:, :Cl], s1, W)
    b1g = _band_conv3x3_np(c1_w[:, Cl:], s1, W)
    b2 = _band_conv3x3_np(c2_w, s2, W)

    # vertical mask zeroing the top/bottom halo rows of the conv1 output so it
    # is exactly the zero-padded plane consumed by conv2.
    vmask = np.ones((H + 2, 1), f32)
    vmask[0, 0] = 0.0
    vmask[H + 1, 0] = 0.0

    return dict(
        Co=Co, Cl=Cl, Cg=Cg, C2=c2_w.shape[0],
        up_w=jnp.asarray(wb, bf16), up_b=jnp.asarray(bb, jnp.float32),
        wgbd=jnp.asarray(wgbd.reshape(Wp * Cg, Wp * F), bf16),
        wxbd=jnp.asarray(wxbd.reshape(Wp * Cl, Wp * F), bf16),
        bgx=jnp.asarray(bgx, jnp.float32),
        wpsel=jnp.asarray(wpsel.reshape(Wp * F, Wp), jnp.float32),
        bpsi=jnp.asarray(bpsi, jnp.float32),
        expand=jnp.asarray(expand.reshape(Wp, Wp * Cl), jnp.float32),
        vmask=jnp.asarray(vmask, jnp.float32),
        b1s=jnp.asarray(b1s, bf16), b1g=jnp.asarray(b1g, bf16),
        sh1=jnp.asarray(_interior_row_np(h1, W), jnp.float32),
        b2=jnp.asarray(b2, bf16),
        sh2=jnp.asarray(_interior_row_np(h2, W), jnp.float32),
    )


def _largest_divisor_leq(n, cap):
    cap = max(1, min(n, cap))
    for d in range(cap, 0, -1):
        if n % d == 0:
            return d
    return 1


# ----------------------------------------------------------------------------
# Kernel 1: ConvTranspose2d(k=2, s=2) on row-flattened inputs.
#   in rows  : (TH, Wx*Cin)
#   out block: (TH, 2, 2*Wx*Co)  -> lane-dense (>=128 lanes), already in the
#              final (N, 2H, 2W, Co) memory order after a contiguous reshape.
# ----------------------------------------------------------------------------
def _convt_kernel(x_ref, w_ref, b_ref, o_ref):
    xf = x_ref[0]                                      # (TH, Wx*Cin) bf16
    for di in range(2):
        y = jnp.dot(xf, w_ref[di], preferred_element_type=jnp.float32)
        y = y + b_ref[...]
        o_ref[0, :, di, :] = y.astype(o_ref.dtype)


def conv_transpose_2x2_s2_rows(x_rows, prep):
    """x_rows: (N, Hx, Wx*Cin) bf16 -> (N, Hx, 2, 2*Wx*Co) bf16."""
    N, H, WC = x_rows.shape
    w_big, b_big = prep["up_w"], prep["up_b"]
    out_cols = b_big.shape[1]
    row_bytes = 2 * (WC + 2 * out_cols)                # bf16 in + out per row
    th = _largest_divisor_leq(H, max(1, (4 << 20) // row_bytes))
    return pl.pallas_call(
        _convt_kernel,
        grid=(N, H // th),
        in_specs=[pl.BlockSpec((1, th, WC), lambda n, t: (n, t, 0)),
                  pl.BlockSpec(w_big.shape, lambda n, t: (0, 0, 0)),
                  pl.BlockSpec(b_big.shape, lambda n, t: (0, 0))],
        out_specs=pl.BlockSpec((1, th, 2, out_cols), lambda n, t: (n, t, 0, 0)),
        out_shape=jax.ShapeDtypeStruct((N, H, 2, out_cols), jnp.bfloat16),
        compiler_params=pltpu.CompilerParams(
            dimension_semantics=("parallel", "parallel"),
            vmem_limit_bytes=32 * 1024 * 1024),
    )(x_rows, w_big, b_big)


# ----------------------------------------------------------------------------
# Bilinear resize (align_corners=False, PyTorch semantics).  In the standard
# UNet configuration the upsampled size already equals the skip size, so this
# is skipped; the gather fallback below is only for the mismatched case.
# TODO(synk): fold a non-identity resize into the fused kernel as two small
#             separable interpolation matmuls instead of this JAX gather.
# ----------------------------------------------------------------------------
def bilinear_resize_nhwc(x, out_h, out_w):
    _, h, w, _ = x.shape

    def src_idx(out_size, in_size):
        scale = in_size / out_size
        o = jnp.arange(out_size, dtype=jnp.float32)
        s = jnp.maximum(scale * (o + 0.5) - 0.5, 0.0)
        i0 = jnp.minimum(jnp.floor(s).astype(jnp.int32), in_size - 1)
        i1 = jnp.minimum(i0 + 1, in_size - 1)
        w1 = s - i0.astype(jnp.float32)
        return i0, i1, 1.0 - w1, w1

    h0, h1, wh0, wh1 = src_idx(out_h, h)
    w0, w1, ww0, ww1 = src_idx(out_w, w)
    top = (x[:, h0, :, :] * wh0[None, :, None, None]
           + x[:, h1, :, :] * wh1[None, :, None, None])
    out = (top[:, :, w0, :] * ww0[None, None, :, None]
           + top[:, :, w1, :] * ww1[None, None, :, None])
    return out


# ----------------------------------------------------------------------------
# Kernel 2 (fused): attention gate + concat + conv3x3/BN/ReLU + conv3x3/BN/ReLU
# All activations stay in row-flattened (row, W*C) form; the only ops are
# matmuls, elementwise math and leading-dim slices.
# ----------------------------------------------------------------------------
def _fused_att_dconv_kernel(g_ref, s_ref, wgbd_ref, wxbd_ref, bgx_ref,
                            wpsel_ref, bpsi_ref, e_ref, vmask_ref,
                            b1s_ref, b1g_ref, sh1_ref, b2_ref, sh2_ref, o_ref):
    H = o_ref.shape[1]                     # output rows
    g_rows = g_ref[0]                      # (H+4, Wp*Cg) bf16, zero-padded
    s_rows = s_ref[0]                      # (H+4, Wp*Cl) bf16, zero-padded

    # --- attention gate: 1x1 convs as block-diagonal matmuls (BN folded) -----
    a = (jnp.dot(g_rows, wgbd_ref[...], preferred_element_type=jnp.float32)
         + jnp.dot(s_rows, wxbd_ref[...], preferred_element_type=jnp.float32)
         + bgx_ref[...])
    a = jnp.maximum(a, 0.0)                                        # (H+4, Wp*F)
    psi = jax.nn.sigmoid(
        jnp.dot(a, wpsel_ref[...], preferred_element_type=jnp.float32)
        + bpsi_ref[...])                                           # (H+4, Wp)
    psi_exp = jnp.dot(psi, e_ref[...],
                      preferred_element_type=jnp.float32)          # (H+4, Wp*Cl)
    sa_rows = (s_rows.astype(jnp.float32) * psi_exp).astype(jnp.bfloat16)

    # --- conv1 3x3 + BN + ReLU: banded-row matmuls, padded-row output --------
    c1_cols = sh1_ref.shape[-1]
    acc1 = jnp.zeros((H + 2, c1_cols), jnp.float32)
    for kh in range(3):
        acc1 = acc1 + jnp.dot(sa_rows[kh:kh + H + 2], b1s_ref[kh],
                              preferred_element_type=jnp.float32)
        acc1 = acc1 + jnp.dot(g_rows[kh:kh + H + 2], b1g_ref[kh],
                              preferred_element_type=jnp.float32)
    # vmask zeroes the top/bottom halo rows -> h1p is exactly the zero-padded
    # conv1 activation plane in row-flattened form (borders are exact zeros).
    h1p = (jnp.maximum(acc1 + sh1_ref[...], 0.0)
           * vmask_ref[...]).astype(jnp.bfloat16)                  # (H+2, Wp*C1)

    # --- conv2 3x3 + BN + ReLU ------------------------------------------------
    c2_cols = sh2_ref.shape[-1]
    acc2 = jnp.zeros((H, c2_cols), jnp.float32)
    for kh in range(3):
        acc2 = acc2 + jnp.dot(h1p[kh:kh + H], b2_ref[kh],
                              preferred_element_type=jnp.float32)
    o_ref[0] = jnp.maximum(acc2 + sh2_ref[...], 0.0)               # (H, Wp*C2)


def _fused_call(gp, sp, prep):
    N, hp4, gcols = gp.shape
    H = hp4 - 4
    scols = sp.shape[2]
    o_cols = prep["sh2"].shape[1]
    weights = [prep["wgbd"], prep["wxbd"], prep["bgx"], prep["wpsel"],
               prep["bpsi"], prep["expand"], prep["vmask"],
               prep["b1s"], prep["b1g"], prep["sh1"], prep["b2"], prep["sh2"]]
    specs = [pl.BlockSpec((1, hp4, gcols), lambda n: (n, 0, 0)),
             pl.BlockSpec((1, hp4, scols), lambda n: (n, 0, 0))]
    for wgt in weights:
        specs.append(pl.BlockSpec(wgt.shape, lambda n, _nd=wgt.ndim: (0,) * _nd))
    return pl.pallas_call(
        _fused_att_dconv_kernel,
        grid=(N,),
        in_specs=specs,
        out_specs=pl.BlockSpec((1, H, o_cols), lambda n: (n, 0, 0)),
        out_shape=jax.ShapeDtypeStruct((N, H, o_cols), jnp.float32),
        compiler_params=pltpu.CompilerParams(
            dimension_semantics=("parallel",),
            vmem_limit_bytes=32 * 1024 * 1024),
    )(gp, sp, *weights)


# ----------------------------------------------------------------------------
# Full UpAttentionBlock forward (NCHW in / NCHW out, like the PyTorch module)
# ----------------------------------------------------------------------------
def up_attention_block_forward(x_nchw, skip_nchw, params):
    N, Cu, Hx, Wx = x_nchw.shape
    _, Cl, Hs, Ws = skip_nchw.shape
    prep = _prepare_params(params, Hs, Ws, Wx)
    Co, C2 = prep["Co"], prep["C2"]

    # 1) self.up: ConvTranspose2d(k=2, s=2)  (row-flattened, bf16)
    x_rows = jnp.transpose(x_nchw, (0, 2, 3, 1)).reshape(N, Hx, Wx * Cu)
    g4 = conv_transpose_2x2_s2_rows(x_rows.astype(jnp.bfloat16), prep)
    g = g4.reshape(N, 2 * Hx, 2 * Wx, Co)        # contiguous reshape, no transpose

    # 2) F.interpolate to the skip size (identity when sizes already match)
    if (2 * Hx, 2 * Wx) != (Hs, Ws):
        g = bilinear_resize_nhwc(g.astype(jnp.float32), Hs, Ws).astype(jnp.bfloat16)

    # 3+4) fused attention gate + concat + double conv3x3/BN/ReLU
    skip = jnp.transpose(skip_nchw, (0, 2, 3, 1)).astype(jnp.bfloat16)
    gp = jnp.pad(g, ((0, 0), (2, 2), (1, 1), (0, 0))).reshape(
        N, Hs + 4, (Ws + 2) * Co)
    sp = jnp.pad(skip, ((0, 0), (2, 2), (1, 1), (0, 0))).reshape(
        N, Hs + 4, (Ws + 2) * Cl)
    out_rows = _fused_call(gp, sp, prep)         # (N, Hs, (Ws+2)*C2) f32

    out = out_rows.reshape(N, Hs, Ws + 2, C2)[:, :, 1:Ws + 1, :]
    return jnp.transpose(out, (0, 3, 1, 2))      # back to NCHW


# ----------------------------------------------------------------------------
# pure-JAX f32 reference (eval-mode BN), for a numerical sanity check
# ----------------------------------------------------------------------------
def _reference_forward(x, skip, params):
    def bn(v, stats, eps=1e-5):
        g_, b_, m_, var_ = stats
        s = g_ / jnp.sqrt(var_ + eps)
        return v * s[None, :, None, None] + (b_ - m_ * s)[None, :, None, None]

    def conv1x1(v, w4):
        return jnp.einsum('nchw,oc->nohw', v, w4[:, :, 0, 0])

    def conv3x3(v, w):
        return jax.lax.conv_general_dilated(
            v, w, (1, 1), ((1, 1), (1, 1)),
            dimension_numbers=('NCHW', 'OIHW', 'NCHW'))

    up = jnp.einsum('ncij,coab->noiajb', x, params["up_w"])
    N, Co, H, _, W, _ = up.shape
    up = up.reshape(N, Co, 2 * H, 2 * W) + params["up_b"][None, :, None, None]
    # interpolate: identity here (upsampled size == skip size)
    g1 = bn(conv1x1(up, params["att_wg"]), params["att_bn_g"])
    x1 = bn(conv1x1(skip, params["att_wx"]), params["att_bn_x"])
    psi = jax.nn.sigmoid(bn(conv1x1(jnp.maximum(g1 + x1, 0.0),
                                    params["att_wpsi"]), params["att_bn_psi"]))
    cat = jnp.concatenate([skip * psi, up], axis=1)
    h = jnp.maximum(bn(conv3x3(cat, params["c1_w"]), params["c1_bn"]), 0.0)
    h = jnp.maximum(bn(conv3x3(h, params["c2_w"]), params["c2_bn"]), 0.0)
    return h


# ----------------------------------------------------------------------------
# main
# ----------------------------------------------------------------------------
if __name__ == "__main__":
    key = jax.random.PRNGKey(0)
    ks = jax.random.split(key, 16)

    # up_in_channels=8, skip_in_channels=4, out_channels=8
    N, Cu, Cs, Co = 2, 8, 4, 8
    Fint = Co // 2
    Hx, Wx = 8, 8        # input spatial (before 2x upsample)
    Hs, Ws = 16, 16      # skip-connection spatial

    def nrm(k, shape, s=0.1):
        return jax.random.normal(k, shape, jnp.float32) * s

    def bn_params(k, c):
        k1, k2, k3, k4 = jax.random.split(k, 4)
        gamma = jax.random.uniform(k1, (c,), jnp.float32, 0.8, 1.2)
        beta = nrm(k2, (c,))
        mean = nrm(k3, (c,))
        var = jax.random.uniform(k4, (c,), jnp.float32, 0.5, 1.5)
        return gamma, beta, mean, var

    params = {
        "up_w": nrm(ks[0], (Cu, Co, 2, 2)),       # ConvTranspose2d (Cin,Cout,2,2)
        "up_b": nrm(ks[1], (Co,)),
        "att_wg": nrm(ks[2], (Fint, Co, 1, 1)),   # torch Conv2d (out,in,1,1)
        "att_bn_g": bn_params(ks[3], Fint),
        "att_wx": nrm(ks[4], (Fint, Cs, 1, 1)),
        "att_bn_x": bn_params(ks[5], Fint),
        "att_wpsi": nrm(ks[6], (1, Fint, 1, 1)),
        "att_bn_psi": bn_params(ks[7], 1),
        "c1_w": nrm(ks[8], (Co, Cs + Co, 3, 3)),  # torch Conv2d (out,in,3,3)
        "c1_bn": bn_params(ks[9], Co),
        "c2_w": nrm(ks[10], (Co, Co, 3, 3)),
        "c2_bn": bn_params(ks[11], Co),
    }

    x = jax.random.normal(ks[12], (N, Cu, Hx, Wx), jnp.float32)
    skip = jax.random.normal(ks[13], (N, Cs, Hs, Ws), jnp.float32)

    out = up_attention_block_forward(x, skip, params)
    out = jax.block_until_ready(out)
    assert out.shape == (N, Co, Hs, Ws), out.shape
    assert bool(jnp.all(jnp.isfinite(out)))

    ref = _reference_forward(x, skip, params)
    err = float(jnp.max(jnp.abs(out - ref)))
    assert err < 0.1, f"mismatch vs f32 reference: max abs err {err}"

    print("KERNEL_OK")
</pallas_src>

<mosaic_0001>
module attributes {stable_mosaic.version = 11 : i64} {
  func.func @_convt_kernel(%arg0: i32, %arg1: i32, %arg2: memref<1x8x64xbf16, #tpu.memory_space<vmem>>, %arg3: memref<2x64x128xbf16, #tpu.memory_space<vmem>>, %arg4: memref<1x128xf32, #tpu.memory_space<vmem>>, %arg5: memref<1x8x2x128xbf16, #tpu.memory_space<vmem>>) attributes {dimension_semantics = [#tpu.dimension_semantics<parallel>, #tpu.dimension_semantics<parallel>], iteration_bounds = array<i64: 2, 1>, scalar_prefetch = 0 : i64, scratch_operands = 0 : i64, tpu.core_type = #tpu.core_type<tc>, window_params = [{transform_indices = @transform_0, window_bounds = array<i64: 1, 8, 64>}, {pipeline_mode = #tpu.pipeline_mode<synchronous>, transform_indices = @transform_1, window_bounds = array<i64: 2, 64, 128>}, {pipeline_mode = #tpu.pipeline_mode<synchronous>, transform_indices = @transform_2, window_bounds = array<i64: 1, 128>}, {transform_indices = @transform_3, window_bounds = array<i64: 1, 8, 2, 128>}]} {
    %c0 = arith.constant 0 : index
    %c0_0 = arith.constant 0 : index
    %c0_1 = arith.constant 0 : index
    %0 = vector.load %arg2[%c0, %c0_0, %c0_1] : memref<1x8x64xbf16, #tpu.memory_space<vmem>>, vector<1x8x64xbf16>
    %1 = vector.shape_cast %0 : vector<1x8x64xbf16> to vector<8x64xbf16>
    %c0_2 = arith.constant 0 : index
    %c0_3 = arith.constant 0 : index
    %c0_4 = arith.constant 0 : index
    %2 = vector.load %arg3[%c0_2, %c0_3, %c0_4] : memref<2x64x128xbf16, #tpu.memory_space<vmem>>, vector<1x64x128xbf16>
    %3 = vector.shape_cast %2 : vector<1x64x128xbf16> to vector<64x128xbf16>
    %cst = arith.constant dense<0.000000e+00> : vector<8x128xf32>
    %4 = tpu.matmul %1, %3, %cst {dimension_numbers = #tpu.dot_dimension_numbers<[1], [0], [0], [1], [0, 0, 1, 1], [], []>} : vector<8x64xbf16>, vector<64x128xbf16>, vector<8x128xf32> -> vector<8x128xf32>
    %c0_5 = arith.constant 0 : index
    %c0_6 = arith.constant 0 : index
    %5 = vector.load %arg4[%c0_5, %c0_6] : memref<1x128xf32, #tpu.memory_space<vmem>>, vector<1x128xf32>
    %6 = vector.broadcast %5 : vector<1x128xf32> to vector<8x128xf32>
    %7 = arith.addf %4, %6 : vector<8x128xf32>
    %8 = arith.truncf %7 : vector<8x128xf32> to vector<8x128xbf16>
    %c0_7 = arith.constant 0 : index
    %c0_8 = arith.constant 0 : index
    %c0_9 = arith.constant 0 : index
    %c0_10 = arith.constant 0 : index
    %9 = vector.load %arg5[%c0_7, %c0_8, %c0_9, %c0_10] : memref<1x8x2x128xbf16, #tpu.memory_space<vmem>>, vector<1x8x1x128xbf16>
    %10 = vector.shape_cast %9 : vector<1x8x1x128xbf16> to vector<8x128xbf16>
    %11 = vector.shape_cast %8 : vector<8x128xbf16> to vector<1x8x1x128xbf16>
    tpu.vector_store %arg5[%c0_7, %c0_8, %c0_9, %c0_10], %11 {strides = array<i32>} : memref<1x8x2x128xbf16, #tpu.memory_space<vmem>>, vector<1x8x1x128xbf16>,
    %c1 = arith.constant 1 : index
    %c0_11 = arith.constant 0 : index
    %c0_12 = arith.constant 0 : index
    %12 = vector.load %arg3[%c1, %c0_11, %c0_12] : memref<2x64x128xbf16, #tpu.memory_space<vmem>>, vector<1x64x128xbf16>
    %13 = vector.shape_cast %12 : vector<1x64x128xbf16> to vector<64x128xbf16>
    %cst_13 = arith.constant dense<0.000000e+00> : vector<8x128xf32>
    %14 = tpu.matmul %1, %13, %cst_13 {dimension_numbers = #tpu.dot_dimension_numbers<[1], [0], [0], [1], [0, 0, 1, 1], [], []>} : vector<8x64xbf16>, vector<64x128xbf16>, vector<8x128xf32> -> vector<8x128xf32>
    %c0_14 = arith.constant 0 : index
    %c0_15 = arith.constant 0 : index
    %15 = vector.load %arg4[%c0_14, %c0_15] : memref<1x128xf32, #tpu.memory_space<vmem>>, vector<1x128xf32>
    %16 = vector.broadcast %15 : vector<1x128xf32> to vector<8x128xf32>
    %17 = arith.addf %14, %16 : vector<8x128xf32>
    %18 = arith.truncf %17 : vector<8x128xf32> to vector<8x128xbf16>
    %c0_16 = arith.constant 0 : index
    %c0_17 = arith.constant 0 : index
    %c1_18 = arith.constant 1 : index
    %c0_19 = arith.constant 0 : index
    %19 = vector.load %arg5[%c0_16, %c0_17, %c1_18, %c0_19] : memref<1x8x2x128xbf16, #tpu.memory_space<vmem>>, vector<1x8x1x128xbf16>
    %20 = vector.shape_cast %19 : vector<1x8x1x128xbf16> to vector<8x128xbf16>
    %21 = vector.shape_cast %18 : vector<8x128xbf16> to vector<1x8x1x128xbf16>
    tpu.vector_store %arg5[%c0_16, %c0_17, %c1_18, %c0_19], %21 {strides = array<i32>} : memref<1x8x2x128xbf16, #tpu.memory_space<vmem>>, vector<1x8x1x128xbf16>,
    return
  }
  func.func @transform_0(%arg0: i32, %arg1: i32) -> (i32, i32, i32) {
    %c0_i32 = arith.constant 0 : i32
    %c0_i32_0 = arith.constant 0 : i32
    return %arg0, %arg1, %c0_i32 : i32, i32, i32
  }
  func.func @transform_1(%arg0: i32, %arg1: i32) -> (i32, i32, i32) {
    %c0_i32 = arith.constant 0 : i32
    %c0_i32_0 = arith.constant 0 : i32
    %c0_i32_1 = arith.constant 0 : i32
    %c0_i32_2 = arith.constant 0 : i32
    return %c0_i32, %c0_i32_0, %c0_i32_1 : i32, i32, i32
  }
  func.func @transform_2(%arg0: i32, %arg1: i32) -> (i32, i32) {
    %c0_i32 = arith.constant 0 : i32
    %c0_i32_0 = arith.constant 0 : i32
    %c0_i32_1 = arith.constant 0 : i32
    return %c0_i32, %c0_i32_0 : i32, i32
  }
  func.func @transform_3(%arg0: i32, %arg1: i32) -> (i32, i32, i32, i32) {
    %c0_i32 = arith.constant 0 : i32
    %c0_i32_0 = arith.constant 0 : i32
    %c0_i32_1 = arith.constant 0 : i32
    return %arg0, %arg1, %c0_i32, %c0_i32_0 : i32, i32, i32, i32
  }
}

</mosaic_0001>

<llo_original>
// kernel: tpu_custom_call.1
$region0: #{tpu_custom_call.1}
  #allocation0 [shape = 'u32[]', space=smem, size = 0x4, offset = 0x4, fixed_abs, tag = 'smem constant byte address 0x4 - core index']
  #allocation1 [shape = 'u32[72,128]{1,0:T(1,128)}', space=vmem, size = 0x9000, scoped, tag = 'internal scratch']
  %s0 = inlined_call_operand.hbm [shape: bf16[2,8,64], index: 0, kind: input, shape index: {}]
  %s1 = inlined_call_operand.hbm [shape: bf16[2,64,128], index: 1, kind: input, shape index: {}]
  %s2 = inlined_call_operand.vmem [shape: f32[1,128], index: 2, kind: input, shape index: {}]
  %s3 = inlined_call_operand.hbm [shape: bf16[2,8,2,128], index: 3, kind: output, shape index: {}]
  %s4 = sld [smem:[#allocation0]]
  $region53: #{tpu_custom_call.1} parent=0
    _
  %s6 = ssub.s32 1, %s4
  %s7 = scalar_select 0, %s6, %s4
  $region1: #{tpu_custom_call.1} parent=0
    #allocation2 [shape = 'u8[4096]{0}', space=vmem, size = 0x1000, scoped, tag = 'input window, operand 0']
    #allocation3 [shape = 's32[2]{0}', space=sflag, size = 0x8, scoped, tag = 'scoped memory for tpu_custom_call.1']
    #allocation4 [shape = 's32[2]{0}', space=sflag, size = 0x8, scoped, tag = 'scoped memory for tpu_custom_call.1']
    #allocation5 [shape = 'u8[32768]{0}', space=vmem, size = 0x8000, scoped, tag = 'input window, operand 1, single buffered']
    #allocation6 [shape = 's32[1]{0}', space=sflag, size = 0x4, scoped, tag = 'scoped memory for tpu_custom_call.1']
    #allocation7 [shape = 'u8[8192]{0}', space=vmem, size = 0x2000, scoped, tag = 'output window, operand 0']
    %8 = vsyncpa [#allocation3], 0
    %s9 = scalar_lea.sflag [#allocation3], 1
    %10 = vsyncpa %s9, 0
    %11 = vsyncpa [#allocation6], 0
    %12 = vsyncpa [#allocation4], 0
    %s13 = scalar_lea.sflag [#allocation4], 1
    %14 = vsyncpa %s13, 0
    loop: start=0, step=1, limit=4
    $region2: #{tpu_custom_call.1} parent=1 // loop_pre_header
      _
    $region3: #{tpu_custom_call.1} parent=1 // loop_header
      %s16 = sphi 0, %s20
      %p17 = scmp.ge.s32.totalorder %s16, 4
      %s23 = sphi 0, %s35
      %s24 = sphi 0, %s31
      %s25 = sphi 0, %s23
      %s26 = sphi 0, %s24
      %s27 = sphi 0, %s25
      %s28 = sphi 0, %s26
      %s40 = sphi 0, %s42
      %s43 = sphi 0, %s40
      %s44 = sphi 0, %s43
      %s60 = sphi 0, %s44
      %s64 = sphi 0, %s64
      %s66 = sphi 0, %s64
      %s67 = sphi 0, %s66
      %s81 = sphi 0, %s67
      %s85 = sphi 0, %s85
      %s87 = sphi 0, %s85
      %s88 = sphi 0, %s87
      %s102 = sphi 0, %s88
      %s110 = sphi 0, %s112
      %s113 = sphi 0, %s110
      %s114 = sphi 0, %s113
      %s130 = sphi 0, %s114
    $region4: #{tpu_custom_call.1} parent=1 // loop_header_branch
      %19 = sbr.rel (%p17) target = $region8
    $region5: #{tpu_custom_call.1} parent=1 // loop_body
      %s21 = ssub.s32 %s16, 1
      %s22 = ssub.s32 %s16, 2
      %s29 = sadd.s32 1, %s24
      %p30 = scmp.ge.s32.totalorder %s29, 1
      %s31 = scalar_select %p30, 0, %s29
      %s32 = sadd.s32 1, %s23
      %s33 = scalar_select %p30, %s32, %s23
      %p34 = scmp.ge.s32.totalorder %s33, 2
      %s35 = scalar_select %p34, 0, %s33
      %s36 = ssub.s32 %s23, %s35
      %s37 = ssub.s32 %s24, %s31
      %s38 = sor.u32 %s36, %s37
      %p39 = scmp.eq.s32.totalorder %s38, 0
      %s41 = sadd.s32 %s40, 1
      %s42 = scalar_select %p39, %s40, %s41
      %p45 = pneg %p39
      %p46 = scmp.eq.s32.totalorder %s16, 1
      %p47 = por %p45, %p46
      %p48 = scmp.ne.s32.totalorder %s40, %s43
      %p49 = scmp.eq.s32.totalorder %s16, 0
      %p50 = por %p48, %p49
      %p51 = scmp.ne.s32.totalorder %s40, %s43
      %p52 = scmp.eq.s32.totalorder %s21, 1
      %p53 = por %p51, %p52
      %p54 = scmp.ne.s32.totalorder %s43, %s44
      %p55 = scmp.eq.s32.totalorder %s21, 0
      %p56 = por %p54, %p55
      %p57 = scmp.ne.s32.totalorder %s43, %s44
      %p58 = scmp.eq.s32.totalorder %s22, 1
      %p59 = por %p57, %p58
      %p61 = scmp.ne.s32.totalorder %s44, %s60
      %p62 = scmp.eq.s32.totalorder %s22, 0
      %p63 = por %p61, %p62
      %s65 = sadd.s32 %s64, 1
      %p68 = scmp.eq.s32.totalorder %s16, 1
      %p69 = scmp.ne.s32.totalorder %s64, %s66
      %p70 = scmp.eq.s32.totalorder %s16, 0
      %p71 = por %p69, %p70
      %p72 = scmp.ne.s32.totalorder %s64, %s66
      %p73 = scmp.eq.s32.totalorder %s21, 1
      %p74 = por %p72, %p73
      %p75 = scmp.ne.s32.totalorder %s66, %s67
      %p76 = scmp.eq.s32.totalorder %s21, 0
      %p77 = por %p75, %p76
      %p78 = scmp.ne.s32.totalorder %s66, %s67
      %p79 = scmp.eq.s32.totalorder %s22, 1
      %p80 = por %p78, %p79
      %p82 = scmp.ne.s32.totalorder %s67, %s81
      %p83 = scmp.eq.s32.totalorder %s22, 0
      %p84 = por %p82, %p83
      %s86 = sadd.s32 %s85, 1
      %p89 = scmp.eq.s32.totalorder %s16, 1
      %p90 = scmp.ne.s32.totalorder %s85, %s87
      %p91 = scmp.eq.s32.totalorder %s16, 0
      %p92 = por %p90, %p91
      %p93 = scmp.ne.s32.totalorder %s85, %s87
      %p94 = scmp.eq.s32.totalorder %s21, 1
      %p95 = por %p93, %p94
      %p96 = scmp.ne.s32.totalorder %s87, %s88
      %p97 = scmp.eq.s32.totalorder %s21, 0
      %p98 = por %p96, %p97
      %p99 = scmp.ne.s32.totalorder %s87, %s88
      %p100 = scmp.eq.s32.totalorder %s22, 1
      %p101 = por %p99, %p100
      %p103 = scmp.ne.s32.totalorder %s88, %s102
      %p104 = scmp.eq.s32.totalorder %s22, 0
      %p105 = por %p103, %p104
      %s106 = ssub.s32 %s23, %s35
      %s107 = ssub.s32 %s24, %s31
      %s108 = sor.u32 %s106, %s107
      %p109 = scmp.eq.s32.totalorder %s108, 0
      %s111 = sadd.s32 %s110, 1
      %s112 = scalar_select %p109, %s110, %s111
      %p115 = pneg %p109
      %p116 = scmp.eq.s32.totalorder %s16, 1
      %p117 = por %p115, %p116
      %p118 = scmp.ne.s32.totalorder %s110, %s113
      %p119 = scmp.eq.s32.totalorder %s16, 0
      %p120 = por %p118, %p119
      %p121 = scmp.ne.s32.totalorder %s110, %s113
      %p122 = scmp.eq.s32.totalorder %s21, 1
      %p123 = por %p121, %p122
      %p124 = scmp.ne.s32.totalorder %s113, %s114
      %p125 = scmp.eq.s32.totalorder %s21, 0
      %p126 = por %p124, %p125
      %p127 = scmp.ne.s32.totalorder %s113, %s114
      %p128 = scmp.eq.s32.totalorder %s22, 1
      %p129 = por %p127, %p128
      %p131 = scmp.ne.s32.totalorder %s114, %s130
      %p132 = scmp.eq.s32.totalorder %s22, 0
      %p133 = por %p131, %p132
      %p134 = scmp.le.s32.totalorder 1, %s16
      %p135 = scmp.lt.s32.totalorder %s16, 3
      %p136 = pnand %p134, %p135
      %p137 = pneg %p136
      // Predicated region
      $region9: #{tpu_custom_call.1} parent=5 // pred_check
        _
      $region10: #{tpu_custom_call.1} parent=5 // pred_check_branch
        %139 = sbr.rel (%p136) target = $region12
      $region11: #{tpu_custom_call.1} parent=5 // pred_region
        %s140 = ssub.s32 %s16, 1
        // Predicated region
        $region13: #{tpu_custom_call.1} parent=11 // pred_check
          %p141 = pneg %p77
        $region14: #{tpu_custom_call.1} parent=11 // pred_check_branch
          %143 = sbr.rel (%p141) target = $region16
        $region15: #{tpu_custom_call.1} parent=11 // pred_region
          %145 = vsyncadd [#allocation6], 0
          %s146 = sshll.u32 %s1, 4
          %s147 = int_to_ptr.hbm [resolvable:$true] %s146
          %s148 = sshll.u32 [#allocation5], 4
          %s149 = int_to_ptr.vmem [resolvable:$true] %s148
          %154 = dma.hbm_to_vmem [thread:$0]  %s147, 1024, %s149, [#allocation6], 64, 64, 4
        $region16: #{tpu_custom_call.1} parent=11 // pred_fallthru
          _
        // Predicated region
        $region17: #{tpu_custom_call.1} parent=11 // pred_check
          %p155 = pneg %p98
        $region18: #{tpu_custom_call.1} parent=11 // pred_check_branch
          %157 = sbr.rel (%p155) target = $region20
        $region19: #{tpu_custom_call.1} parent=11 // pred_region
          _
        $region20: #{tpu_custom_call.1} parent=11 // pred_fallthru
          _
      $region12: #{tpu_custom_call.1} parent=5 // pred_fallthru
        _
      %p158 = scmp.lt.s32.totalorder %s16, 2
      // Predicated region
      $region21: #{tpu_custom_call.1} parent=5 // pred_check
        %p159 = pneg %p158
      $region22: #{tpu_custom_call.1} parent=5 // pred_check_branch
        %161 = sbr.rel (%p159) target = $region24
      $region23: #{tpu_custom_call.1} parent=5 // pred_region
        // Predicated region
        $region25: #{tpu_custom_call.1} parent=23 // pred_check
          %p162 = pneg %p50
        $region26: #{tpu_custom_call.1} parent=23 // pred_check_branch
          %164 = sbr.rel (%p162) target = $region28
        $region27: #{tpu_custom_call.1} parent=23 // pred_region
          %s165 = sand.u32 %s40, 1
          %s166 = scalar_lea.sflag [#allocation3], %s165
          %s167 = sand.u32 %s40, 1
          %s168 = smul.addr %s167, 4
          %s169 = scalar_lea.vmem [#allocation2], %s168
          %171 = vsyncadd %s166, 0
          %s172 = sadd.s32 %s24, %s23
          %s173 = smul.addr %s172, 4
          %s174 = scalar_lea.hbm %s0, %s173
          %s176 = sshll.u32 %s174, 4
          %s177 = int_to_ptr.hbm [resolvable:$true] %s176
          %s178 = sshll.u32 %s169, 4
          %s179 = int_to_ptr.vmem [resolvable:$true] %s178
          %181 = dma.hbm_to_vmem [thread:$0]  %s177, 64, %s179, %s166
        $region28: #{tpu_custom_call.1} parent=23 // pred_fallthru
          _
      $region24: #{tpu_custom_call.1} parent=5 // pred_fallthru
        _
      %p182 = scmp.le.s32.totalorder 1, %s16
      %p183 = scmp.lt.s32.totalorder %s16, 3
      %p184 = pnand %p182, %p183
      %p185 = pneg %p184
      // Predicated region
      $region29: #{tpu_custom_call.1} parent=5 // pred_check
        _
      $region30: #{tpu_custom_call.1} parent=5 // pred_check_branch
        %187 = sbr.rel (%p184) target = $region32
      $region31: #{tpu_custom_call.1} parent=5 // pred_region
        %s188 = ssub.s32 %s16, 1
        %s189 = sand.u32 %s43, 1
        %s190 = scalar_lea.sflag [#allocation3], %s189
        %s191 = sand.u32 %s43, 1
        %s192 = smul.addr %s191, 4
        %s193 = scalar_lea.vmem [#allocation2], %s192
        // Predicated region
        $region33: #{tpu_custom_call.1} parent=31 // pred_check
          %p194 = pneg %p56
        $region34: #{tpu_custom_call.1} parent=31 // pred_check_branch
          %196 = sbr.rel (%p194) target = $region36
        $region35: #{tpu_custom_call.1} parent=31 // pred_region
          %198 = dma.done %s190, 64
        $region36: #{tpu_custom_call.1} parent=31 // pred_fallthru
          _
        // Predicated region
        $region37: #{tpu_custom_call.1} parent=31 // pred_check
          %p199 = pneg %p77
        $region38: #{tpu_custom_call.1} parent=31 // pred_check_branch
          %201 = sbr.rel (%p199) target = $region40
        $region39: #{tpu_custom_call.1} parent=31 // pred_region
          %203 = dma.done [#allocation6], 1024
        $region40: #{tpu_custom_call.1} parent=31 // pred_fallthru
          _
        %s204 = sand.u32 %s43, 1
        %s205 = scalar_lea.sflag [#allocation3], %s204
        %s206 = sand.u32 %s43, 1
        %s207 = smul.addr %s206, 4
        %s208 = scalar_lea.vmem [#allocation2], %s207
        %p209 = pneg %p56
        %p210 = pneg %p53
        %p211 = pneg %p77
        %p212 = pneg %p74
        %p213 = pneg %p98
        %p214 = pneg %p95
        %p215 = pneg %p126
        %p216 = pneg %p123
        %s217 = sand.u32 %s113, 1
        %s218 = scalar_lea.sflag [#allocation4], %s217
        %s219 = sand.u32 %s113, 1
        %s220 = smul.addr %s219, 8
        %s221 = scalar_lea.vmem [#allocation7], %s220
        %s222 = smul.u32 8, %s26
        %v224 = vld [vmem:[%s193] sm:$0xf]
        %v225 = vld [vmem:[#allocation5] sm:$0xf]
        %v226 = vld [vmem:[#allocation5 + $0x4] sm:$0xf]
        %v227 = vld [vmem:[#allocation5 + $0x8] sm:$0xf]
        %v228 = vld [vmem:[#allocation5 + $0xc] sm:$0xf]
        %v229 = vld [vmem:[#allocation5 + $0x10] sm:$0xf]
        %v230 = vld [vmem:[#allocation5 + $0x14] sm:$0xf]
        %v231 = vld [vmem:[#allocation5 + $0x18] sm:$0xf]
        %v232 = vld [vmem:[#allocation5 + $0x1c] sm:$0xf]
        %v233 = vld [vmem:[%s2] sm:$0x1]
        %v235 = vperm.slane %v233, 0
        %v245 = vunpack.c.l.b16 %v225
        %v246 = vunpack.c.l.b16 %v226
        %v247 = vunpack.c.l.b16 %v227
        %v248 = vunpack.c.l.b16 %v228
        %v249 = vunpack.c.l.b16 %v229
        %v250 = vunpack.c.l.b16 %v230
        %v251 = vunpack.c.l.b16 %v231
        %v252 = vunpack.c.l.b16 %v232
        %v253 = vpack.c.b16 %v246, %v245
        %v254 = vpack.c.b16 %v248, %v247
        %v255 = vpack.c.b16 %v250, %v249
        %v256 = vpack.c.b16 %v252, %v251
        %vm261 = vcmask 523264
        %v263 = vsel %vm261, %v224, 0
        %265 = vmatpush.bf16.msra.mxu0 0
        %266 = vmatpush.bf16.msra.mxu0 0
        %267 = vmatpush.bf16.msra.mxu0 0
        %268 = vmatpush.bf16.msra.mxu0 0
        %269 = vmatpush.bf16.msra.mxu0 %v256
        %270 = vmatpush.bf16.msra.mxu0 %v255
        %271 = vmatpush.bf16.msra.mxu0 %v254
        %272 = vmatpush.bf16.msra.mxu0 %v253
        %273 = vmatmul.bf16.gmra.mxu0 %v263
        %v274 = vpop.f32.mrf.mxu0
        %v275 = vadd.f32 %v235, %v274
        %v276 = vpop.f32.mrf.mxu0
        %277 = vdwg.mxu0
        %v278 = vpack.c.bf16 %v275, %v275
        %v280 = vrot.slane %v278, 3
        %vm281 = vcmask 1040384
        %v284 = vsel %vm281, %v278, %v280
        %vm286 = vcmask 1041409
        %v287 = vsel %vm286, %v278, %v280
        %v289 = vrot.slane %v287, 1
        %vm290 = vcmask 1042434
        %v291 = vsel %vm290, %v278, %v280
        %v293 = vrot.slane %v291, 2
        %vm294 = vcmask 1043459
        %v295 = vsel %vm294, %v278, %v280
        %v297 = vrot.slane %v295, 3
        %v298 = vunpack.i.l.s16 %v284
        %v299 = vunpack.i.h.s16 %v284
        %v300 = vunpack.i.l.s16 %v289
        %v301 = vunpack.i.h.s16 %v289
        %v302 = vunpack.i.l.s16 %v293
        %v303 = vunpack.i.h.s16 %v293
        %v304 = vunpack.i.l.s16 %v297
        %v305 = vunpack.i.h.s16 %v297
        %v306 = vpack.i.b16 %v298, %v298
        %v307 = vpack.i.b16 %v299, %v299
        %v308 = vpack.i.b16 %v300, %v300
        %v309 = vpack.i.b16 %v301, %v301
        %v310 = vpack.i.b16 %v302, %v302
        %v311 = vpack.i.b16 %v303, %v303
        %v312 = vpack.i.b16 %v304, %v304
        %v313 = vpack.i.b16 %v305, %v305
        %vm322 = vcmask 1040384
        %vm323 = vsmask.f32 256
        %vm324 = vmand %vm322, %vm323
        %v325 = vld [vmem:[%s221] sm:$0x1]
        %v326 = vsel %vm324, %v306, %v325
        %327 = vst [vmem:[%s221] sm:$0x1] %v326
        %v328 = vld [vmem:[%s221 + $0x1] sm:$0x1]
        %v329 = vsel %vm324, %v307, %v328
        %330 = vst [vmem:[%s221 + $0x1] sm:$0x1] %v329
        %v331 = vld [vmem:[%s221 + $0x2] sm:$0x1]
        %v332 = vsel %vm324, %v308, %v331
        %333 = vst [vmem:[%s221 + $0x2] sm:$0x1] %v332
        %v334 = vld [vmem:[%s221 + $0x3] sm:$0x1]
        %v335 = vsel %vm324, %v309, %v334
        %336 = vst [vmem:[%s221 + $0x3] sm:$0x1] %v335
        %v337 = vld [vmem:[%s221 + $0x4] sm:$0x1]
        %v338 = vsel %vm324, %v310, %v337
        %339 = vst [vmem:[%s221 + $0x4] sm:$0x1] %v338
        %v340 = vld [vmem:[%s221 + $0x5] sm:$0x1]
        %v341 = vsel %vm324, %v311, %v340
        %342 = vst [vmem:[%s221 + $0x5] sm:$0x1] %v341
        %v343 = vld [vmem:[%s221 + $0x6] sm:$0x1]
        %v344 = vsel %vm324, %v312, %v343
        %345 = vst [vmem:[%s221 + $0x6] sm:$0x1] %v344
        %v346 = vld [vmem:[%s221 + $0x7] sm:$0x1]
        %v347 = vsel %vm324, %v313, %v346
        %348 = vst [vmem:[%s221 + $0x7] sm:$0x1] %v347
        %s349 = scalar_lea.vmem [#allocation5], 32
        %v350 = vld [vmem:[%s349] sm:$0xf]
        %v351 = vld [vmem:[%s349 + $0x4] sm:$0xf]
        %v352 = vld [vmem:[%s349 + $0x8] sm:$0xf]
        %v353 = vld [vmem:[%s349 + $0xc] sm:$0xf]
        %v354 = vld [vmem:[%s349 + $0x10] sm:$0xf]
        %v355 = vld [vmem:[%s349 + $0x14] sm:$0xf]
        %v356 = vld [vmem:[%s349 + $0x18] sm:$0xf]
        %v357 = vld [vmem:[%s349 + $0x1c] sm:$0xf]
        %v358 = vld [vmem:[%s2] sm:$0x1]
        %v360 = vperm.slane %v358, 0
        %v370 = vunpack.c.l.b16 %v350
        %v371 = vunpack.c.l.b16 %v351
        %v372 = vunpack.c.l.b16 %v352
        %v373 = vunpack.c.l.b16 %v353
        %v374 = vunpack.c.l.b16 %v354
        %v375 = vunpack.c.l.b16 %v355
        %v376 = vunpack.c.l.b16 %v356
        %v377 = vunpack.c.l.b16 %v357
        %v378 = vpack.c.b16 %v371, %v370
        %v379 = vpack.c.b16 %v373, %v372
        %v380 = vpack.c.b16 %v375, %v374
        %v381 = vpack.c.b16 %v377, %v376
        %386 = vmatpush.bf16.msra.mxu0 0
        %387 = vmatpush.bf16.msra.mxu0 0
        %388 = vmatpush.bf16.msra.mxu0 0
        %389 = vmatpush.bf16.msra.mxu0 0
        %390 = vmatpush.bf16.msra.mxu0 %v381
        %391 = vmatpush.bf16.msra.mxu0 %v380
        %392 = vmatpush.bf16.msra.mxu0 %v379
        %393 = vmatpush.bf16.msra.mxu0 %v378
        %394 = vmatmul.bf16.gmra.mxu0 %v263
        %v395 = vpop.f32.mrf.mxu0
        %v396 = vadd.f32 %v360, %v395
        %v397 = vpop.f32.mrf.mxu0
        %398 = vdwg.mxu0
        %v399 = vpack.c.bf16 %v396, %v396
        %v401 = vrot.slane %v399, 3
        %v404 = vsel %vm281, %v399, %v401
        %v406 = vsel %vm286, %v399, %v401
        %v408 = vrot.slane %v406, 1
        %v409 = vsel %vm290, %v399, %v401
        %v411 = vrot.slane %v409, 2
        %v412 = vsel %vm294, %v399, %v401
        %v414 = vrot.slane %v412, 3
        %v415 = vunpack.i.l.s16 %v404
        %v416 = vunpack.i.h.s16 %v404
        %v417 = vunpack.i.l.s16 %v408
        %v418 = vunpack.i.h.s16 %v408
        %v419 = vunpack.i.l.s16 %v411
        %v420 = vunpack.i.h.s16 %v411
        %v421 = vunpack.i.l.s16 %v414
        %v422 = vunpack.i.h.s16 %v414
        %v423 = vpack.i.b16 %v415, %v415
        %v424 = vpack.i.b16 %v416, %v416
        %v425 = vpack.i.b16 %v417, %v417
        %v426 = vpack.i.b16 %v418, %v418
        %v427 = vpack.i.b16 %v419, %v419
        %v428 = vpack.i.b16 %v420, %v420
        %v429 = vpack.i.b16 %v421, %v421
        %v430 = vpack.i.b16 %v422, %v422
        %vm439 = vsmask.f32 7938
        %vm440 = vmand %vm322, %vm439
        %v441 = vld [vmem:[%s221] sm:$0x1]
        %v442 = vsel %vm440, %v423, %v441
        %443 = vst [vmem:[%s221] sm:$0x1] %v442
        %v444 = vld [vmem:[%s221 + $0x1] sm:$0x1]
        %v445 = vsel %vm440, %v424, %v444
        %446 = vst [vmem:[%s221 + $0x1] sm:$0x1] %v445
        %v447 = vld [vmem:[%s221 + $0x2] sm:$0x1]
        %v448 = vsel %vm440, %v425, %v447
        %449 = vst [vmem:[%s221 + $0x2] sm:$0x1] %v448
        %v450 = vld [vmem:[%s221 + $0x3] sm:$0x1]
        %v451 = vsel %vm440, %v426, %v450
        %452 = vst [vmem:[%s221 + $0x3] sm:$0x1] %v451
        %v453 = vld [vmem:[%s221 + $0x4] sm:$0x1]
        %v454 = vsel %vm440, %v427, %v453
        %455 = vst [vmem:[%s221 + $0x4] sm:$0x1] %v454
        %v456 = vld [vmem:[%s221 + $0x5] sm:$0x1]
        %v457 = vsel %vm440, %v428, %v456
        %458 = vst [vmem:[%s221 + $0x5] sm:$0x1] %v457
        %v459 = vld [vmem:[%s221 + $0x6] sm:$0x1]
        %v460 = vsel %vm440, %v429, %v459
        %461 = vst [vmem:[%s221 + $0x6] sm:$0x1] %v460
        %v462 = vld [vmem:[%s221 + $0x7] sm:$0x1]
        %v463 = vsel %vm440, %v430, %v462
        %464 = vst [vmem:[%s221 + $0x7] sm:$0x1] %v463
        %s465 = sand.u32 %s113, 1
        %s466 = scalar_lea.sflag [#allocation4], %s465
        %s467 = sand.u32 %s113, 1
        %s468 = smul.addr %s467, 8
        %s469 = scalar_lea.vmem [#allocation7], %s468
        // Predicated region
        $region41: #{tpu_custom_call.1} parent=31 // pred_check
          %p470 = pneg %p123
        $region42: #{tpu_custom_call.1} parent=31 // pred_check_branch
          %472 = sbr.rel (%p470) target = $region44
        $region43: #{tpu_custom_call.1} parent=31 // pred_region
          %s473 = smul.u32 8, %s26
          %475 = vsyncadd %s466, 0
          %s476 = smul.addr %s25, 8
          %s477 = sadd.s32 %s473, %s476
          %s478 = scalar_lea.hbm %s3, %s477
          %s479 = sshll.u32 %s469, 4
          %s480 = int_to_ptr.vmem [resolvable:$true] %s479
          %s481 = sshll.u32 %s478, 4
          %s482 = int_to_ptr.hbm [resolvable:$true] %s481
          %487 = dma.vmem_to_hbm [thread:$0]  %s480, 128, %s482, %s466, 16, 16, 1
        $region44: #{tpu_custom_call.1} parent=31 // pred_fallthru
          _
      $region32: #{tpu_custom_call.1} parent=5 // pred_fallthru
        _
      %p488 = scmp.le.s32.totalorder 2, %s16
      // Predicated region
      $region45: #{tpu_custom_call.1} parent=5 // pred_check
        %p489 = pneg %p488
      $region46: #{tpu_custom_call.1} parent=5 // pred_check_branch
        %491 = sbr.rel (%p489) target = $region48
      $region47: #{tpu_custom_call.1} parent=5 // pred_region
        %s492 = ssub.s32 %s16, 2
        // Predicated region
        $region49: #{tpu_custom_call.1} parent=47 // pred_check
          %p493 = pneg %p129
        $region50: #{tpu_custom_call.1} parent=47 // pred_check_branch
          %495 = sbr.rel (%p493) target = $region52
        $region51: #{tpu_custom_call.1} parent=47 // pred_region
          %s496 = sand.u32 %s114, 1
          %s497 = scalar_lea.sflag [#allocation4], %s496
          %s498 = sand.u32 %s114, 1
          %s499 = smul.addr %s498, 8
          %s500 = scalar_lea.vmem [#allocation7], %s499
          %502 = dma.done %s497, 128
        $region52: #{tpu_custom_call.1} parent=47 // pred_fallthru
          _
      $region48: #{tpu_custom_call.1} parent=5 // pred_fallthru
        _
    $region6: #{tpu_custom_call.1} parent=1 // loop_footer
      %s20 = sadd.s32 1, %s16
    $region7: #{tpu_custom_call.1} parent=1 // loop_footer_branch
      %15 = sbr.rel target = $region3
    $region8: #{tpu_custom_call.1} parent=1 // loop_exit
      _
    %503 = vsyncpa [#allocation3], 1
    %s504 = scalar_lea.sflag [#allocation3], 1
    %505 = vsyncpa %s504, 1
    %506 = vsyncpa [#allocation6], 1
    %507 = vsyncpa [#allocation4], 1
    %s508 = scalar_lea.sflag [#allocation4], 1
    %509 = vsyncpa %s508, 1

</llo_original>
